<compile_context>
chip_gen: v5e
topology: v5e:2x2
jax: 0.10.0
libtpu: 0.0.40
codegen_flags: <defaults>
</compile_context>

<pallas_src>
import functools

import jax
import jax.numpy as jnp
from jax.experimental import pallas as pl
from jax.experimental.pallas import tpu as pltpu


def _round_up(x, m):
    return (x + m - 1) // m * m


def _pcc_kernel(consts_ref, w_ref, tmpl_ref, out_ref, *, mprime, t_total,
                lane_tile):
    """sqrt( (C1*S1 - C2*S2)^2 / (C3*(C1*S3 - S2^2)) ) per lane (= timestep).

    consts_ref: (3,) float32 SMEM      — [C1, C2, C3] hoisted template constants.
    w_ref     : (M'*N, lane_tile) f32 VMEM — unfolded sliding windows; column t
                is the window ending at timestep t (flattened row-major).
    tmpl_ref  : (M'*N, 1) f32 VMEM     — flattened template (only needed for S1).
    out_ref   : (8, lane_tile) f32 VMEM — sqrt(r) broadcast over sublanes
                (lane- and sublane-dense → unmasked stores).
    """
    c1 = consts_ref[0]
    c2 = consts_ref[1]
    c3 = consts_ref[2]

    w = w_ref[...]                                   # (M'N, L) f32
    tm = tmpl_ref[...]                               # (M'N, 1) f32

    # Per-timestep window statistics: sublane reductions on VPU/XLU (no MXU).
    s1 = jnp.sum(w * tm, axis=0, keepdims=True)      # (1, L)
    s2 = jnp.sum(w, axis=0, keepdims=True)           # (1, L)
    s3 = jnp.sum(w * w, axis=0, keepdims=True)       # (1, L)

    num = c1 * s1 - c2 * s2
    den = c3 * (c1 * s3 - s2 * s2)
    ratio = (num * num) / den        # torch int-tensor `/` -> float semantics
    # NOTE: a degenerate (constant) window/template gives den == 0 -> inf/NaN,
    # matching the torch module's behavior for real timesteps.

    # Mask fill-phase timesteps (torch returns 0 while the window fills) and
    # the zero-padded lanes beyond the real stream (0/0 -> NaN there).
    lane = jax.lax.broadcasted_iota(jnp.int32, (1, lane_tile), 1)
    t_idx = pl.program_id(0) * lane_tile + lane
    valid = jnp.logical_and(t_idx >= (mprime - 1), t_idx < t_total)
    r = jnp.where(valid, ratio, jnp.float32(0.0))

    out_ref[...] = jnp.broadcast_to(jnp.sqrt(r), out_ref.shape)   # r ** (1/2)


def pcc_forward(template, bins):
    """Batched functional equivalent of running PCC.forward on each row of
    `bins` in order, starting from a freshly-initialized module.

    template: (Mprime, N) int32   bins: (T, N) int32   ->   (T,) float32
    """
    mprime, n = template.shape
    t_total, n2 = bins.shape
    assert n2 == n
    mn = mprime * n

    # --- Template constants, hoisted out of the kernel (computed once). ------
    tmpl_i = template.astype(jnp.int32)
    c1 = jnp.float32(mn)                                          # Mprime * N
    c2 = jnp.sum(tmpl_i).astype(jnp.float32)
    c3 = c1 * jnp.sum(tmpl_i * tmpl_i).astype(jnp.float32) - c2 * c2
    consts = jnp.stack([c1, c2, c3]).astype(jnp.float32)          # -> SMEM

    # --- Lane-dense layout: timestep on the 128-lane axis. -------------------
    tpad = _round_up(max(t_total, 1), 128)
    lane_tile = tpad if tpad <= 1024 else 1024
    if tpad % lane_tile:
        tpad = _round_up(tpad, lane_tile)

    # Unfold the sliding windows once in plain JAX (layout plumbing, not
    # compute): window ending at timestep t is rows t-M'+1..t of the stream
    # front-padded with M'-1 zero rows (reproduces the fill-then-slide window).
    bins_f = bins.astype(jnp.float32)
    padded = jnp.concatenate(
        [jnp.zeros((mprime - 1, n), jnp.float32), bins_f], axis=0)  # (T+M'-1, N)
    win = jnp.stack([padded[k:k + t_total] for k in range(mprime)],
                    axis=1)                                         # (T, M', N)
    w = win.reshape(t_total, mn).T                                  # (M'*N, T)
    w = jnp.pad(w, ((0, 0), (0, tpad - t_total)))                   # (M'*N, Tpad)

    tmpl_col = template.astype(jnp.float32).reshape(mn, 1)

    kernel = functools.partial(_pcc_kernel, mprime=mprime, t_total=t_total,
                               lane_tile=lane_tile)

    out = pl.pallas_call(
        kernel,
        out_shape=jax.ShapeDtypeStruct((8, tpad), jnp.float32),
        grid=(tpad // lane_tile,),
        in_specs=[
            pl.BlockSpec(memory_space=pltpu.MemorySpace.SMEM),       # consts
            pl.BlockSpec((mn, lane_tile), lambda i: (0, i)),         # windows
            pl.BlockSpec((mn, 1), lambda i: (0, 0)),                 # template
        ],
        out_specs=pl.BlockSpec((8, lane_tile), lambda i: (0, i)),
        compiler_params=pltpu.CompilerParams(
            dimension_semantics=("parallel",)),
    )(consts, w, tmpl_col)

    return out[0, :t_total]


if __name__ == "__main__":
    import numpy as np

    # Module defaults: M=20, N=6, B=5  ->  Mprime = 4.
    M, N, B = 20, 6, 5
    Mprime = M // B
    assert M % B == 0

    key = jax.random.PRNGKey(0)
    k_tmpl, k_bins = jax.random.split(key)

    # `data` argument of PCC.__init__: binary template of shape (Mprime, N).
    template = jax.random.randint(k_tmpl, (Mprime, N), 0, 2, dtype=jnp.int32)

    # A small stream of timestep bins (covers both fill and sliding phases).
    T = 16
    bins = jax.random.randint(k_bins, (T, N), 0, 2, dtype=jnp.int32)

    out = jax.jit(pcc_forward)(template, bins)
    out = jax.block_until_ready(out)
    out_np = np.asarray(out)

    # Pure NumPy reference reproducing the torch module's stateful loop (int64).
    tmpl_np = np.asarray(template, dtype=np.int64)
    bins_np = np.asarray(bins, dtype=np.int64)
    C1 = Mprime * N
    C2 = int(tmpl_np.sum())
    C3 = C1 * int((tmpl_np ** 2).sum()) - C2 ** 2
    wprime = np.zeros((Mprime, N), dtype=np.int64)
    timestep = 0
    ref = []
    for t in range(T):
        b = bins_np[t]
        if timestep < Mprime:
            wprime[timestep] = b
            timestep += 1
            r = 0.0
        else:
            wprime = np.concatenate([wprime[1:], b[None, :]], axis=0)
        if timestep == Mprime:
            S1 = int((wprime * tmpl_np).sum())
            S2 = int(wprime.sum())
            S3 = int((wprime ** 2).sum())
            r = (C1 * S1 - C2 * S2) ** 2 / (C3 * (C1 * S3 - S2 ** 2))
        ref.append(r ** 0.5)
    ref = np.asarray(ref, dtype=np.float32)

    np.testing.assert_allclose(out_np, ref, rtol=1e-5, atol=1e-6)
    print("KERNEL_OK")
</pallas_src>

<mosaic_0001>
module attributes {stable_mosaic.version = 11 : i64} {
  func.func @_pcc_kernel(%arg0: i32, %arg1: memref<3xf32, #tpu.memory_space<smem>>, %arg2: memref<24x128xf32, #tpu.memory_space<vmem>>, %arg3: memref<24x1xf32, #tpu.memory_space<vmem>>, %arg4: memref<8x128xf32, #tpu.memory_space<vmem>>) attributes {dimension_semantics = [#tpu.dimension_semantics<parallel>], iteration_bounds = array<i64: 1>, scalar_prefetch = 0 : i64, scratch_operands = 0 : i64, tpu.core_type = #tpu.core_type<tc>, window_params = [{transform_indices = @transform_0, window_bounds = array<i64: 3>}, {transform_indices = @transform_1, window_bounds = array<i64: 24, 128>}, {pipeline_mode = #tpu.pipeline_mode<synchronous>, transform_indices = @transform_2, window_bounds = array<i64: 24, 1>}, {transform_indices = @transform_3, window_bounds = array<i64: 8, 128>}]} {
    %c0 = arith.constant 0 : index
    %0 = memref.load %arg1[%c0] : memref<3xf32, #tpu.memory_space<smem>>
    %c1 = arith.constant 1 : index
    %1 = memref.load %arg1[%c1] : memref<3xf32, #tpu.memory_space<smem>>
    %c2 = arith.constant 2 : index
    %2 = memref.load %arg1[%c2] : memref<3xf32, #tpu.memory_space<smem>>
    %c0_0 = arith.constant 0 : index
    %c0_1 = arith.constant 0 : index
    %3 = vector.load %arg2[%c0_0, %c0_1] : memref<24x128xf32, #tpu.memory_space<vmem>>, vector<24x128xf32>
    %c0_2 = arith.constant 0 : index
    %c0_3 = arith.constant 0 : index
    %4 = vector.load %arg3[%c0_2, %c0_3] : memref<24x1xf32, #tpu.memory_space<vmem>>, vector<24x1xf32>
    %5 = vector.broadcast %4 : vector<24x1xf32> to vector<24x128xf32>
    %6 = arith.mulf %3, %5 : vector<24x128xf32>
    %cst = arith.constant dense<0.000000e+00> : vector<128xf32>
    %7 = vector.multi_reduction <add>, %6, %cst [0] : vector<24x128xf32> to vector<128xf32>
    %8 = vector.shape_cast %7 : vector<128xf32> to vector<1x128xf32>
    %cst_4 = arith.constant dense<0.000000e+00> : vector<128xf32>
    %9 = vector.multi_reduction <add>, %3, %cst_4 [0] : vector<24x128xf32> to vector<128xf32>
    %10 = vector.shape_cast %9 : vector<128xf32> to vector<1x128xf32>
    %11 = arith.mulf %3, %3 : vector<24x128xf32>
    %cst_5 = arith.constant dense<0.000000e+00> : vector<128xf32>
    %12 = vector.multi_reduction <add>, %11, %cst_5 [0] : vector<24x128xf32> to vector<128xf32>
    %13 = vector.shape_cast %12 : vector<128xf32> to vector<1x128xf32>
    %14 = vector.broadcast %0 : f32 to vector<1x128xf32>
    %15 = arith.mulf %14, %8 : vector<1x128xf32>
    %16 = vector.broadcast %1 : f32 to vector<1x128xf32>
    %17 = arith.mulf %16, %10 : vector<1x128xf32>
    %18 = arith.subf %15, %17 : vector<1x128xf32>
    %19 = vector.broadcast %0 : f32 to vector<1x128xf32>
    %20 = arith.mulf %19, %13 : vector<1x128xf32>
    %21 = arith.mulf %10, %10 : vector<1x128xf32>
    %22 = arith.subf %20, %21 : vector<1x128xf32>
    %23 = vector.broadcast %2 : f32 to vector<1x128xf32>
    %24 = arith.mulf %23, %22 : vector<1x128xf32>
    %25 = arith.mulf %18, %18 : vector<1x128xf32>
    %26 = arith.divf %25, %24 : vector<1x128xf32>
    %27 = tpu.iota {dimensions = array<i32: 1>} : vector<1x128xi32>
    %c128_i32 = arith.constant 128 : i32
    %28 = arith.muli %arg0, %c128_i32 : i32
    %29 = vector.broadcast %28 : i32 to vector<1x128xi32>
    %30 = arith.addi %29, %27 : vector<1x128xi32>
    %c3_i32 = arith.constant 3 : i32
    %31 = vector.broadcast %c3_i32 : i32 to vector<1x128xi32>
    %32 = arith.cmpi sge, %30, %31 : vector<1x128xi32>
    %c16_i32 = arith.constant 16 : i32
    %33 = vector.broadcast %c16_i32 : i32 to vector<1x128xi32>
    %34 = arith.cmpi slt, %30, %33 : vector<1x128xi32>
    %35 = arith.andi %32, %34 : vector<1x128xi1>
    %cst_6 = arith.constant 0.000000e+00 : f32
    %36 = vector.broadcast %cst_6 : f32 to vector<1x128xf32>
    %37 = arith.select %35, %26, %36 : vector<1x128xi1>, vector<1x128xf32>
    %38 = math.sqrt %37 : vector<1x128xf32>
    %39 = vector.shape_cast %38 : vector<1x128xf32> to vector<1x128xf32>
    %40 = vector.broadcast %39 : vector<1x128xf32> to vector<8x128xf32>
    %c0_7 = arith.constant 0 : index
    %c0_8 = arith.constant 0 : index
    %41 = vector.load %arg4[%c0_7, %c0_8] : memref<8x128xf32, #tpu.memory_space<vmem>>, vector<8x128xf32>
    tpu.vector_store %arg4[%c0_7, %c0_8], %40 {strides = array<i32>} : memref<8x128xf32, #tpu.memory_space<vmem>>, vector<8x128xf32>,
    return
  }
  func.func @transform_0(%arg0: i32) -> i32 {
    %c0_i32 = arith.constant 0 : i32
    %c0_i32_0 = arith.constant 0 : i32
    return %c0_i32 : i32
  }
  func.func @transform_1(%arg0: i32) -> (i32, i32) {
    %c0_i32 = arith.constant 0 : i32
    %c0_i32_0 = arith.constant 0 : i32
    return %c0_i32, %arg0 : i32, i32
  }
  func.func @transform_2(%arg0: i32) -> (i32, i32) {
    %c0_i32 = arith.constant 0 : i32
    %c0_i32_0 = arith.constant 0 : i32
    %c0_i32_1 = arith.constant 0 : i32
    return %c0_i32, %c0_i32_0 : i32, i32
  }
  func.func @transform_3(%arg0: i32) -> (i32, i32) {
    %c0_i32 = arith.constant 0 : i32
    %c0_i32_0 = arith.constant 0 : i32
    return %c0_i32, %arg0 : i32, i32
  }
}

</mosaic_0001>

<llo_original>
// kernel: pcc_forward.1
$region0: #{pcc_forward.1}
  #allocation0 [shape = 'u32[]', space=smem, size = 0x4, offset = 0x4, fixed_abs, tag = 'smem constant byte address 0x4 - core index']
  #allocation1 [shape = 'u32[72,128]{1,0:T(1,128)}', space=vmem, size = 0x9000, scoped, tag = 'internal scratch']
  %s0 = inlined_call_operand.vmem [shape: f32[3], index: 0, kind: input, shape index: {}]
  %s1 = inlined_call_operand.vmem [shape: f32[24,128], index: 1, kind: input, shape index: {}]
  %s2 = inlined_call_operand.vmem [shape: f32[24,1], index: 2, kind: input, shape index: {}]
  %s3 = inlined_call_operand.vmem [shape: f32[8,128], index: 3, kind: output, shape index: {}]
  %s4 = sld [smem:[#allocation0]]
  $region26: #{pcc_forward.1} parent=0
    _
  %s6 = ssub.s32 1, %s4
  %s7 = scalar_select 0, %s6, %s4
  $region1: #{pcc_forward.1} parent=0
    #allocation2 [shape = 'u8[512]{0}', space=smem, size = 0x200, scoped, tag = 'input window, operand 0, single buffered']
    #allocation3 [shape = 's32[1]{0}', space=sflag, size = 0x4, scoped, tag = 'scoped memory for pcc_forward.1']
    %8 = vsyncpa [#allocation3], 0
    // Predicated region
    $region2: #{pcc_forward.1} parent=1 // pred_check
      _
    $region3: #{pcc_forward.1} parent=1 // pred_check_branch
      %10 = sbr.rel (0) target = $region5
    $region4: #{pcc_forward.1} parent=1 // pred_region
      %12 = vsyncadd [#allocation3], 0
      %s14 = sshll.u32 %s0, 4
      %s15 = int_to_ptr.vmem [resolvable:$true] %s14
      %17 = dma.vmem_to_smem %s15, 16, [#allocation2], [#allocation3]
    $region5: #{pcc_forward.1} parent=1 // pred_fallthru
      _
    // Predicated region
    $region6: #{pcc_forward.1} parent=1 // pred_check
      _
    $region7: #{pcc_forward.1} parent=1 // pred_check_branch
      %19 = sbr.rel (0) target = $region9
    $region8: #{pcc_forward.1} parent=1 // pred_region
      _
    $region9: #{pcc_forward.1} parent=1 // pred_fallthru
      _
    // Predicated region
    $region10: #{pcc_forward.1} parent=1 // pred_check
      _
    $region11: #{pcc_forward.1} parent=1 // pred_check_branch
      %21 = sbr.rel (0) target = $region13
    $region12: #{pcc_forward.1} parent=1 // pred_region
      _
    $region13: #{pcc_forward.1} parent=1 // pred_fallthru
      _
    // Predicated region
    $region14: #{pcc_forward.1} parent=1 // pred_check
      _
    $region15: #{pcc_forward.1} parent=1 // pred_check_branch
      %23 = sbr.rel (0) target = $region17
    $region16: #{pcc_forward.1} parent=1 // pred_region
      %25 = dma.done [#allocation3], 16
    $region17: #{pcc_forward.1} parent=1 // pred_fallthru
      _
    %26 = sfence
    %s27 = sld [smem:[#allocation2]]
    %s28 = sld [smem:[#allocation2 + $0x1]]
    %s29 = sld [smem:[#allocation2 + $0x2]]
    %v30 = vld [vmem:[%s1] sm:$0xff]
    %v31 = vld [vmem:[%s1 + $0x8] sm:$0xff]
    %v32 = vld [vmem:[%s1 + $0x10] sm:$0xff]
    %v33 = vld [vmem:[%s2] sm:$0xff]
    %v34 = vld [vmem:[%s2 + $0x8] sm:$0xff]
    %v35 = vld [vmem:[%s2 + $0x10] sm:$0xff]
    %37 = vset.pattern.permute.xlu0 0
    %38 = vperm.xlu0 %37, %v33
    %v39 = vpop.permute.xlu0 %38
    %42 = vset.pattern.permute.xlu0 0
    %43 = vperm.xlu0 %42, %v34
    %v44 = vpop.permute.xlu0 %43
    %47 = vset.pattern.permute.xlu0 0
    %48 = vperm.xlu0 %47, %v35
    %v49 = vpop.permute.xlu0 %48
    %v51 = vmul.f32 %v30, %v39
    %v52 = vmul.f32 %v31, %v44
    %v53 = vmul.f32 %v32, %v49
    %v54 = vadd.f32 %v51, %v52
    %v55 = vadd.f32 %v54, %v53
    %v56 = vrot.slane %v55, 4
    %v57 = vadd.f32 %v55, %v56
    %v58 = vrot.slane %v57, 2
    %v59 = vadd.f32 %v57, %v58
    %v60 = vrot.slane %v59, 1
    %v61 = vadd.f32 %v59, %v60
    %v62 = vadd.f32 %v30, %v31
    %v63 = vadd.f32 %v62, %v32
    %v64 = vrot.slane %v63, 4
    %v65 = vadd.f32 %v63, %v64
    %v66 = vrot.slane %v65, 2
    %v67 = vadd.f32 %v65, %v66
    %v68 = vrot.slane %v67, 1
    %v69 = vadd.f32 %v67, %v68
    %v70 = vmul.f32 %v30, %v30
    %v71 = vmul.f32 %v31, %v31
    %v72 = vmul.f32 %v32, %v32
    %v73 = vadd.f32 %v70, %v71
    %v74 = vadd.f32 %v73, %v72
    %v75 = vrot.slane %v74, 4
    %v76 = vadd.f32 %v74, %v75
    %v77 = vrot.slane %v76, 2
    %v78 = vadd.f32 %v76, %v77
    %v79 = vrot.slane %v78, 1
    %v80 = vadd.f32 %v78, %v79
    %v81 = vstv %s27
    %v82 = vmul.f32 %v81, %v61
    %v83 = vstv %s28
    %v84 = vmul.f32 %v83, %v69
    %v85 = vsub.f32 %v82, %v84
    %v86 = vmul.f32 %v81, %v80
    %v87 = vmul.f32 %v69, %v69
    %v88 = vsub.f32 %v86, %v87
    %v89 = vstv %s29
    %v90 = vmul.f32 %v89, %v88
    %v91 = vmul.f32 %v85, %v85
    %v92 = vrcp.pop %v90
    %v93 = vmul.f32 %v90, %v92
    %v94 = vsub.f32 1.0, %v93
    %v95 = vmul.f32 %v92, %v94
    %v96 = vadd.f32 %v92, %v95
    %vm97 = vweird.f32 %v90
    %vm98 = vweird.f32 %v92
    %vm99 = vmor %vm97, %vm98
    %v100 = vsel %vm99, %v92, %v96
    %v101 = vand.u32 2147483647, %v90
    %vm102 = vcmp.eq.f32.partialorder %v101, 8.507059e+37
    %v103 = vand.u32 %v90, 2147483648
    %v104 = vor.u32 1.1754944e-38, %v103
    %v105 = vsel %vm102, %v104, %v100
    %v106 = vmul.f32 %v91, %v105
    %v107 = vlaneseq
    %v108 = vand.u32 %v107, 127
    %s109 = smul.u32 0, 128
    %v110 = vstv %s109
    %v111 = vadd.s32 %v110, %v108
    %vm112 = vcmp.ge.s32.totalorder %v111, 3
    %vm113 = vcmp.lt.s32.totalorder %v111, 16
    %vm114 = vmand %vm112, %vm113
    %v115 = vsel %vm114, %v106, 0.0
    %v116 = vrsqrt.pop %v115
    %v117 = vmul.f32 %v116, %v115
    %v118 = vmul.f32 %v117, %v116
    %v119 = vmul.f32 0.5, %v118
    %v120 = vsub.f32 1.5, %v119
    %v121 = vmul.f32 %v116, %v120
    %v122 = vmul.f32 %v115, %v121
    %vm123 = vcmp.eq.f32.partialorder %v115, inf
    %v124 = vsel %vm123, %v115, %v122
    %vm125 = vcmp.eq.f32.partialorder %v115, 0.0
    %v126 = vand.u32 %v115, 2147483648
    %v127 = vsel %vm125, %v126, %v124
    %128 = vst [vmem:[%s3] sm:$0xff] %v127
    // Predicated region
    $region18: #{pcc_forward.1} parent=1 // pred_check
      _
    $region19: #{pcc_forward.1} parent=1 // pred_check_branch
      %130 = sbr.rel (0) target = $region21
    $region20: #{pcc_forward.1} parent=1 // pred_region
      _
    $region21: #{pcc_forward.1} parent=1 // pred_fallthru
      _
    // Predicated region
    $region22: #{pcc_forward.1} parent=1 // pred_check
      _
    $region23: #{pcc_forward.1} parent=1 // pred_check_branch
      %132 = sbr.rel (0) target = $region25
    $region24: #{pcc_forward.1} parent=1 // pred_region
      _
    $region25: #{pcc_forward.1} parent=1 // pred_fallthru
      _
    %133 = vsyncpa [#allocation3], 1

</llo_original>
